<compile_context>
chip_gen: v7x
topology: tpu7x:2x2x1
jax: 0.10.0
libtpu: 0.0.40
codegen_flags: <defaults>
</compile_context>

<pallas_src>
import jax
import jax.numpy as jnp
from jax import lax
from jax.experimental import pallas as pl
from jax.experimental.pallas import tpu as pltpu

_LANES = 128
_SUBLANES = 8
_EPS = 0.0001
_MAX_TILE_ROWS = 1024  # 1024x128 f32 = 512 KiB/input tile; 2 inputs x 2 bufs ~ 2 MiB


def _make_dice_kernel(rows, tile_rows, tiles_per_split, need_mask):
    def kernel(x_ref, t_ref, part_ref, acc_i_ref, acc_u_ref):
        c = pl.program_id(0)   # parallel split (megacore on v7x)
        i = pl.program_id(1)   # reduction over tiles within the split

        @pl.when(i == 0)
        def _():
            acc_i_ref[...] = jnp.zeros_like(acc_i_ref)
            acc_u_ref[...] = jnp.zeros_like(acc_u_ref)

        # Stream original dtype from HBM; widen once in-vreg (f32 accumulate,
        # safe on v5e which has no bf16 VPU path).
        x = x_ref[...].astype(jnp.float32)
        t = t_ref[...].astype(jnp.float32)

        if need_mask:
            base = (c * tiles_per_split + i) * tile_rows
            row_ids = base + lax.broadcasted_iota(
                jnp.int32, (tile_rows, _LANES), 0)
            valid = row_ids < rows
            x = jnp.where(valid, x, 0.0)
            t = jnp.where(valid, t, 0.0)

        # Pure-VPU accumulation into (8,128) vector accumulators (elementwise
        # vreg adds over the leading axis); no per-tile XLU reduction and no
        # loop-carried scalar RMW chain.
        acc_i_ref[...] += jnp.sum((x * t).reshape(-1, _SUBLANES, _LANES), axis=0)
        acc_u_ref[...] += jnp.sum((x + t).reshape(-1, _SUBLANES, _LANES), axis=0)

        # Single final cross-lane/sublane reduce per split.
        @pl.when(i == tiles_per_split - 1)
        def _():
            part_ref[0, 0] = jnp.sum(acc_i_ref[...])
            part_ref[0, 1] = jnp.sum(acc_u_ref[...])

    return kernel


def _to_rows128(a):
    """Flatten to (rows, 128) in the ORIGINAL dtype, rows a multiple of 8.

    Only pads (which costs a copy) when the element count is not already a
    multiple of 8*128; typical NCHW tensors need no copy at all.
    """
    flat = a.reshape(-1)
    n = flat.shape[0]
    pad = (-n) % (_SUBLANES * _LANES)
    if pad:
        flat = jnp.concatenate([flat, jnp.zeros((pad,), flat.dtype)])
    return flat.reshape(-1, _LANES)


def dice_loss_pallas(x, target, num_labels=2, max_tile_rows=_MAX_TILE_ROWS):
    # TODO(synk): num_labels > 2 path (per-label == comparisons) not needed for
    # the default binary case; only num_labels == 2 is implemented here.
    assert num_labels == 2, "only binary dice (num_labels=2) implemented"

    x2d = _to_rows128(x)
    t2d = _to_rows128(target)
    rows = x2d.shape[0]                      # multiple of 8

    tile_rows = min(max_tile_rows, rows)     # multiple of 8 by construction
    n_tiles = pl.cdiv(rows, tile_rows)
    n_split = 2 if n_tiles >= 2 else 1       # 2 TCs on v7x; serial elsewhere
    tiles_per_split = pl.cdiv(n_tiles, n_split)
    covered_rows = n_split * tiles_per_split * tile_rows
    need_mask = covered_rows != rows

    def in_index_map(c, i):
        # Clamp so over-covering split/tail blocks never index past the array;
        # their rows are zeroed by the in-kernel mask anyway.
        blk = c * tiles_per_split + i
        return (jnp.minimum(blk, n_tiles - 1), 0)

    kernel = _make_dice_kernel(rows, tile_rows, tiles_per_split, need_mask)

    parts = pl.pallas_call(
        kernel,
        out_shape=jax.ShapeDtypeStruct((n_split, 2), jnp.float32),
        grid_spec=pltpu.PrefetchScalarGridSpec(
            num_scalar_prefetch=0,
            grid=(n_split, tiles_per_split),
            in_specs=[
                pl.BlockSpec((tile_rows, _LANES), in_index_map),
                pl.BlockSpec((tile_rows, _LANES), in_index_map),
            ],
            out_specs=pl.BlockSpec(
                (1, 2), lambda c, i: (c, 0), memory_space=pltpu.SMEM),
            scratch_shapes=[
                pltpu.VMEM((_SUBLANES, _LANES), jnp.float32),
                pltpu.VMEM((_SUBLANES, _LANES), jnp.float32),
            ],
        ),
        compiler_params=pltpu.CompilerParams(
            dimension_semantics=("parallel", "arbitrary"),
        ),
    )(x2d, t2d)

    inter = jnp.sum(parts[:, 0])
    union = jnp.sum(parts[:, 1])
    dice = (2.0 * inter + _EPS) / (union + _EPS)
    dice = dice / (num_labels - 1)
    return -dice


def _dice_loss_ref(x, target):
    xf = x.astype(jnp.float32).reshape(-1)
    tf = target.astype(jnp.float32).reshape(-1)
    inter = jnp.sum(xf * tf)
    union = jnp.sum(xf) + jnp.sum(tf)
    return -((2.0 * inter + _EPS) / (union + _EPS))


if __name__ == "__main__":
    key = jax.random.PRNGKey(0)

    # Primary case: NCHW matching the PyTorch convention (batch=2, channels=4, 16x16).
    kx, kt, kx2, kt2 = jax.random.split(key, 4)
    x = jax.nn.sigmoid(jax.random.normal(kx, (2, 4, 16, 16), jnp.float32))
    target = (jax.random.uniform(kt, (2, 4, 16, 16)) > 0.5).astype(jnp.float32)

    loss = jax.block_until_ready(dice_loss_pallas(x, target))
    ref = _dice_loss_ref(x, target)
    assert jnp.allclose(loss, ref, rtol=1e-5, atol=1e-6), (loss, ref)

    # Secondary case exercising multi-tile, 2-way split and the tail mask.
    x2 = jax.nn.sigmoid(jax.random.normal(kx2, (3, 4, 96, 120), jnp.float32))
    t2 = (jax.random.uniform(kt2, (3, 4, 96, 120)) > 0.5).astype(jnp.float32)
    loss2 = jax.block_until_ready(dice_loss_pallas(x2, t2))
    ref2 = _dice_loss_ref(x2, t2)
    assert jnp.allclose(loss2, ref2, rtol=1e-5, atol=1e-6), (loss2, ref2)

    print("KERNEL_OK")
</pallas_src>

<mosaic_0001>
module attributes {stable_mosaic.version = 11 : i64} {
  func.func @kernel(%arg0: i32, %arg1: i32, %arg2: memref<16x128xf32, #tpu.memory_space<vmem>>, %arg3: memref<16x128xf32, #tpu.memory_space<vmem>>, %arg4: memref<1x2xf32, #tpu.memory_space<smem>>, %arg5: memref<8x128xf32, #tpu.memory_space<vmem>>, %arg6: memref<8x128xf32, #tpu.memory_space<vmem>>) attributes {dimension_semantics = [#tpu.dimension_semantics<parallel>, #tpu.dimension_semantics<arbitrary>], iteration_bounds = array<i64: 1, 1>, scalar_prefetch = 0 : i64, scratch_operands = 2 : i64, tpu.core_type = #tpu.core_type<tc>, window_params = [{transform_indices = @transform_0, window_bounds = array<i64: 16, 128>}, {transform_indices = @transform_1, window_bounds = array<i64: 16, 128>}, {transform_indices = @transform_2, window_bounds = array<i64: 1, 2>}]} {
    %c0_i32 = arith.constant 0 : i32
    %0 = arith.cmpi eq, %arg1, %c0_i32 : i32
    %1 = arith.extui %0 : i1 to i32
    %c0_i32_0 = arith.constant 0 : i32
    %2 = arith.cmpi ne, %1, %c0_i32_0 : i32
    scf.if %2 {
      %cst_15 = arith.constant 0.000000e+00 : f32
      %20 = vector.broadcast %cst_15 : f32 to vector<8x128xf32>
      %c0_16 = arith.constant 0 : index
      %c0_17 = arith.constant 0 : index
      %21 = vector.load %arg5[%c0_16, %c0_17] : memref<8x128xf32, #tpu.memory_space<vmem>>, vector<8x128xf32>
      tpu.vector_store %arg5[%c0_16, %c0_17], %20 {strides = array<i32>} : memref<8x128xf32, #tpu.memory_space<vmem>>, vector<8x128xf32>,
      %cst_18 = arith.constant 0.000000e+00 : f32
      %22 = vector.broadcast %cst_18 : f32 to vector<8x128xf32>
      %c0_19 = arith.constant 0 : index
      %c0_20 = arith.constant 0 : index
      %23 = vector.load %arg6[%c0_19, %c0_20] : memref<8x128xf32, #tpu.memory_space<vmem>>, vector<8x128xf32>
      tpu.vector_store %arg6[%c0_19, %c0_20], %22 {strides = array<i32>} : memref<8x128xf32, #tpu.memory_space<vmem>>, vector<8x128xf32>,
    } else {
    }
    %c0 = arith.constant 0 : index
    %c0_1 = arith.constant 0 : index
    %3 = vector.load %arg2[%c0, %c0_1] : memref<16x128xf32, #tpu.memory_space<vmem>>, vector<16x128xf32>
    %c0_2 = arith.constant 0 : index
    %c0_3 = arith.constant 0 : index
    %4 = vector.load %arg3[%c0_2, %c0_3] : memref<16x128xf32, #tpu.memory_space<vmem>>, vector<16x128xf32>
    %c0_4 = arith.constant 0 : index
    %c0_5 = arith.constant 0 : index
    %5 = vector.load %arg5[%c0_4, %c0_5] : memref<8x128xf32, #tpu.memory_space<vmem>>, vector<8x128xf32>
    %6 = arith.mulf %3, %4 : vector<16x128xf32>
    %7 = vector.shape_cast %6 : vector<16x128xf32> to vector<2x8x128xf32>
    %cst = arith.constant dense<0.000000e+00> : vector<8x128xf32>
    %8 = vector.multi_reduction <add>, %7, %cst [0] : vector<2x8x128xf32> to vector<8x128xf32>
    %9 = arith.addf %5, %8 : vector<8x128xf32>
    %c0_6 = arith.constant 0 : index
    %c0_7 = arith.constant 0 : index
    %10 = vector.load %arg5[%c0_6, %c0_7] : memref<8x128xf32, #tpu.memory_space<vmem>>, vector<8x128xf32>
    tpu.vector_store %arg5[%c0_6, %c0_7], %9 {strides = array<i32>} : memref<8x128xf32, #tpu.memory_space<vmem>>, vector<8x128xf32>,
    %c0_8 = arith.constant 0 : index
    %c0_9 = arith.constant 0 : index
    %11 = vector.load %arg6[%c0_8, %c0_9] : memref<8x128xf32, #tpu.memory_space<vmem>>, vector<8x128xf32>
    %12 = arith.addf %3, %4 : vector<16x128xf32>
    %13 = vector.shape_cast %12 : vector<16x128xf32> to vector<2x8x128xf32>
    %cst_10 = arith.constant dense<0.000000e+00> : vector<8x128xf32>
    %14 = vector.multi_reduction <add>, %13, %cst_10 [0] : vector<2x8x128xf32> to vector<8x128xf32>
    %15 = arith.addf %11, %14 : vector<8x128xf32>
    %c0_11 = arith.constant 0 : index
    %c0_12 = arith.constant 0 : index
    %16 = vector.load %arg6[%c0_11, %c0_12] : memref<8x128xf32, #tpu.memory_space<vmem>>, vector<8x128xf32>
    tpu.vector_store %arg6[%c0_11, %c0_12], %15 {strides = array<i32>} : memref<8x128xf32, #tpu.memory_space<vmem>>, vector<8x128xf32>,
    %c0_i32_13 = arith.constant 0 : i32
    %17 = arith.cmpi eq, %arg1, %c0_i32_13 : i32
    %18 = arith.extui %17 : i1 to i32
    %c0_i32_14 = arith.constant 0 : i32
    %19 = arith.cmpi ne, %18, %c0_i32_14 : i32
    scf.if %19 {
      %c0_15 = arith.constant 0 : index
      %c0_16 = arith.constant 0 : index
      %20 = vector.load %arg5[%c0_15, %c0_16] : memref<8x128xf32, #tpu.memory_space<vmem>>, vector<8x128xf32>
      %21 = vector.shape_cast %20 : vector<8x128xf32> to vector<1x8x128xf32>
      %cst_17 = arith.constant dense<0.000000e+00> : vector<1xf32>
      %22 = vector.multi_reduction <add>, %21, %cst_17 [1, 2] : vector<1x8x128xf32> to vector<1xf32>
      %23 = vector.shape_cast %22 : vector<1xf32> to vector<1x1x1xf32>
      %24 = vector.extract %23[0, 0, 0] : f32 from vector<1x1x1xf32>
      %c0_18 = arith.constant 0 : index
      %c0_19 = arith.constant 0 : index
      %25 = memref.load %arg4[%c0_18, %c0_19] : memref<1x2xf32, #tpu.memory_space<smem>>
      memref.store %24, %arg4[%c0_18, %c0_19] : memref<1x2xf32, #tpu.memory_space<smem>>
      %c0_20 = arith.constant 0 : index
      %c0_21 = arith.constant 0 : index
      %26 = vector.load %arg6[%c0_20, %c0_21] : memref<8x128xf32, #tpu.memory_space<vmem>>, vector<8x128xf32>
      %27 = vector.shape_cast %26 : vector<8x128xf32> to vector<1x8x128xf32>
      %cst_22 = arith.constant dense<0.000000e+00> : vector<1xf32>
      %28 = vector.multi_reduction <add>, %27, %cst_22 [1, 2] : vector<1x8x128xf32> to vector<1xf32>
      %29 = vector.shape_cast %28 : vector<1xf32> to vector<1x1x1xf32>
      %30 = vector.extract %29[0, 0, 0] : f32 from vector<1x1x1xf32>
      %c0_23 = arith.constant 0 : index
      %c1 = arith.constant 1 : index
      %31 = memref.load %arg4[%c0_23, %c1] : memref<1x2xf32, #tpu.memory_space<smem>>
      memref.store %30, %arg4[%c0_23, %c1] : memref<1x2xf32, #tpu.memory_space<smem>>
    } else {
    }
    return
  }
  func.func @transform_0(%arg0: i32, %arg1: i32) -> (i32, i32) {
    %c1_i32 = arith.constant 1 : i32
    %0 = arith.muli %arg0, %c1_i32 : i32
    %1 = arith.addi %0, %arg1 : i32
    %c0_i32 = arith.constant 0 : i32
    %2 = arith.minsi %1, %c0_i32 : i32
    %c0_i32_0 = arith.constant 0 : i32
    %c0_i32_1 = arith.constant 0 : i32
    return %2, %c0_i32_0 : i32, i32
  }
  func.func @transform_1(%arg0: i32, %arg1: i32) -> (i32, i32) {
    %c1_i32 = arith.constant 1 : i32
    %0 = arith.muli %arg0, %c1_i32 : i32
    %1 = arith.addi %0, %arg1 : i32
    %c0_i32 = arith.constant 0 : i32
    %2 = arith.minsi %1, %c0_i32 : i32
    %c0_i32_0 = arith.constant 0 : i32
    %c0_i32_1 = arith.constant 0 : i32
    return %2, %c0_i32_0 : i32, i32
  }
  func.func @transform_2(%arg0: i32, %arg1: i32) -> (i32, i32) {
    %c0_i32 = arith.constant 0 : i32
    %c0_i32_0 = arith.constant 0 : i32
    return %arg0, %c0_i32 : i32, i32
  }
}

</mosaic_0001>

<llo_original>
// kernel: tpu_custom_call.1
$region0: #{tpu_custom_call.1}
  #allocation0 [shape = 'u32[]', space=smem, size = 0x4, offset = 0x4, fixed_abs, tag = 'smem constant byte address 0x4 - core index']
  #allocation1 [shape = 'u32[144,128]{1,0:T(1,128)}', space=vmem, size = 0x12000, scoped, tag = 'internal scratch']
  #allocation2 [shape = 'f32[8,128]{1,0:T(8,128)}', space=vmem, size = 0x1000, scoped, tag = 'scratch operand']
  #allocation3 [shape = 'f32[8,128]{1,0:T(8,128)}', space=vmem, size = 0x1000, scoped, tag = 'scratch operand']
  %s0 = inlined_call_operand.hbm [shape: f32[16,128], index: 0, kind: input, shape index: {}]
  %s1 = inlined_call_operand.hbm [shape: f32[16,128], index: 1, kind: input, shape index: {}]
  %s2 = inlined_call_operand.hbm [shape: f32[1,2], index: 2, kind: output, shape index: {}]
  %s3 = sld [smem:[#allocation0]]
  $region34: #{tpu_custom_call.1} parent=0
    _
  %s5 = ssub.s32 1, %s3
  %s6 = scalar_select 0, %s5, %s3
  $region1: #{tpu_custom_call.1} parent=0
    #allocation4 [shape = 'u8[8192]{0}', space=vmem, size = 0x2000, scoped, tag = 'input window, operand 0, single buffered']
    #allocation5 [shape = 's32[1]{0}', space=sflag, size = 0x4, scoped, tag = 'scoped memory for tpu_custom_call.1']
    #allocation6 [shape = 's32[1]{0}', space=sflag, size = 0x4, scoped, tag = 'scoped memory for tpu_custom_call.1']
    #allocation7 [shape = 'u8[8192]{0}', space=vmem, size = 0x2000, scoped, tag = 'input window, operand 1, single buffered']
    #allocation8 [shape = 's32[1]{0}', space=sflag, size = 0x4, scoped, tag = 'scoped memory for tpu_custom_call.1']
    #allocation9 [shape = 'u8[512]{0}', space=smem, size = 0x200, scoped, tag = 'output window, operand 0, single buffered']
    %7 = vsyncpa [#allocation5], 0
    %8 = vsyncpa [#allocation8], 0
    %9 = vsyncpa [#allocation6], 0
    // Predicated region
    $region2: #{tpu_custom_call.1} parent=1 // pred_check
      _
    $region3: #{tpu_custom_call.1} parent=1 // pred_check_branch
      %11 = sbr.rel (0) target = $region5
    $region4: #{tpu_custom_call.1} parent=1 // pred_region
      %s12 = sadd.s32 0, 0
      %p13 = scmp.lt.s32.totalorder %s12, 0
      %s14 = scalar_select %p13, %s12, 0
      %s15 = smul.u32 2, %s14
      %s17 = ssub.s32 256, 256
      %18 = vsyncadd [#allocation5], %s17
      %s19 = smul.addr %s15, 128
      %s20 = scalar_lea.hbm %s0, %s19
      %s21 = sshll.u32 [#allocation4], 4
      %s22 = int_to_ptr.vmem [resolvable:$true] %s21
      %27 = dma.hbm_to_vmem [thread:$0]  %s20, 256, %s22, [#allocation5], 128, 128, 8
    $region5: #{tpu_custom_call.1} parent=1 // pred_fallthru
      _
    // Predicated region
    $region6: #{tpu_custom_call.1} parent=1 // pred_check
      _
    $region7: #{tpu_custom_call.1} parent=1 // pred_check_branch
      %29 = sbr.rel (0) target = $region9
    $region8: #{tpu_custom_call.1} parent=1 // pred_region
      %s30 = sadd.s32 0, 0
      %p31 = scmp.lt.s32.totalorder %s30, 0
      %s32 = scalar_select %p31, %s30, 0
      %s33 = smul.u32 2, %s32
      %s35 = ssub.s32 256, 256
      %36 = vsyncadd [#allocation8], %s35
      %s37 = smul.addr %s33, 128
      %s38 = scalar_lea.hbm %s1, %s37
      %s39 = sshll.u32 [#allocation7], 4
      %s40 = int_to_ptr.vmem [resolvable:$true] %s39
      %45 = dma.hbm_to_vmem [thread:$0]  %s38, 256, %s40, [#allocation8], 128, 128, 8
    $region9: #{tpu_custom_call.1} parent=1 // pred_fallthru
      _
    // Predicated region
    $region10: #{tpu_custom_call.1} parent=1 // pred_check
      _
    $region11: #{tpu_custom_call.1} parent=1 // pred_check_branch
      %47 = sbr.rel (0) target = $region13
    $region12: #{tpu_custom_call.1} parent=1 // pred_region
      %48 = dma.done [#allocation5], 256
    $region13: #{tpu_custom_call.1} parent=1 // pred_fallthru
      _
    // Predicated region
    $region14: #{tpu_custom_call.1} parent=1 // pred_check
      _
    $region15: #{tpu_custom_call.1} parent=1 // pred_check_branch
      %50 = sbr.rel (0) target = $region17
    $region16: #{tpu_custom_call.1} parent=1 // pred_region
      %51 = dma.done [#allocation8], 256
    $region17: #{tpu_custom_call.1} parent=1 // pred_fallthru
      _
    %s52 = sadd.s32 0, 0
    %p53 = scmp.lt.s32.totalorder %s52, 0
    %s54 = scalar_select %p53, %s52, 0
    %s55 = smul.u32 2, %s54
    %s56 = sadd.s32 0, 0
    %p57 = scmp.lt.s32.totalorder %s56, 0
    %s58 = scalar_select %p57, %s56, 0
    %s59 = smul.u32 2, %s58
    %p60 = scmp.eq.s32.totalorder 0, 0
    // Predicated region
    $region18: #{tpu_custom_call.1} parent=1 // pred_check
      %p61 = pneg %p60
    $region19: #{tpu_custom_call.1} parent=1 // pred_check_branch
      %63 = sbr.rel (%p61) target = $region21
    $region20: #{tpu_custom_call.1} parent=1 // pred_region
      %64 = vst [vmem:[#allocation2] sm:$0xff] 0.0
      %65 = vst [vmem:[#allocation3] sm:$0xff] 0.0
    $region21: #{tpu_custom_call.1} parent=1 // pred_fallthru
      _
    %v66 = vld [vmem:[#allocation4] sm:$0xff]
    %v67 = vld [vmem:[#allocation4 + $0x8] sm:$0xff]
    %v68 = vld [vmem:[#allocation7] sm:$0xff]
    %v69 = vld [vmem:[#allocation7 + $0x8] sm:$0xff]
    %v70 = vld [vmem:[#allocation2] sm:$0xff]
    %v71 = vmul.f32 %v66, %v68
    %v72 = vmul.f32 %v67, %v69
    %v73 = vadd.f32 %v71, %v72
    %v74 = vadd.f32 %v70, %v73
    %75 = vst [vmem:[#allocation2] sm:$0xff] %v74
    %v76 = vld [vmem:[#allocation3] sm:$0xff]
    %v77 = vadd.f32 %v66, %v68
    %v78 = vadd.f32 %v67, %v69
    %v79 = vadd.f32 %v77, %v78
    %v80 = vadd.f32 %v76, %v79
    %81 = vst [vmem:[#allocation3] sm:$0xff] %v80
    // Predicated region
    $region22: #{tpu_custom_call.1} parent=1 // pred_check
      %p82 = pneg %p60
    $region23: #{tpu_custom_call.1} parent=1 // pred_check_branch
      %84 = sbr.rel (%p82) target = $region25
    $region24: #{tpu_custom_call.1} parent=1 // pred_region
      %v85 = vld [vmem:[#allocation2] sm:$0xff]
      %86 = vadd.xlane.f32.xlu0 %v85
      %v87 = vpop.xlane.xlu0 %86
      %v88 = vrot.slane %v87, 4
      %v89 = vadd.f32 %v87, %v88
      %v90 = vrot.slane %v89, 2
      %v91 = vadd.f32 %v89, %v90
      %v92 = vrot.slane %v91, 1
      %v93 = vadd.f32 %v91, %v92
      %s94 = vtos %v93
      %s95 = scalar_lea.smem [#allocation9], 0
      %96 = sst [smem:[%s95]] %s94
      %v97 = vld [vmem:[#allocation3] sm:$0xff]
      %98 = vadd.xlane.f32.xlu0 %v97
      %v99 = vpop.xlane.xlu0 %98
      %v100 = vrot.slane %v99, 4
      %v101 = vadd.f32 %v99, %v100
      %v102 = vrot.slane %v101, 2
      %v103 = vadd.f32 %v101, %v102
      %v104 = vrot.slane %v103, 1
      %v105 = vadd.f32 %v103, %v104
      %s106 = vtos %v105
      %s107 = scalar_lea.smem [#allocation9], 1
      %108 = sst [smem:[%s107]] %s106
    $region25: #{tpu_custom_call.1} parent=1 // pred_fallthru
      _
    // Predicated region
    $region26: #{tpu_custom_call.1} parent=1 // pred_check
      _
    $region27: #{tpu_custom_call.1} parent=1 // pred_check_branch
      %110 = sbr.rel (0) target = $region29
    $region28: #{tpu_custom_call.1} parent=1 // pred_region
      %s112 = ssub.s32 16, 16
      %113 = vsyncadd [#allocation6], %s112
      %116 = dma.smem_to_hbm [#allocation9], 16, %s2, [#allocation6]
    $region29: #{tpu_custom_call.1} parent=1 // pred_fallthru
      _
    // Predicated region
    $region30: #{tpu_custom_call.1} parent=1 // pred_check
      _
    $region31: #{tpu_custom_call.1} parent=1 // pred_check_branch
      %118 = sbr.rel (0) target = $region33
    $region32: #{tpu_custom_call.1} parent=1 // pred_region
      %119 = dma.done [#allocation6], 16
    $region33: #{tpu_custom_call.1} parent=1 // pred_fallthru
      _
    %120 = sfence
    %121 = vsyncpa [#allocation5], 1
    %122 = vsyncpa [#allocation8], 1
    %123 = vsyncpa [#allocation6], 1

</llo_original>
